<compile_context>
chip_gen: v6e
topology: v6e:2x2x1
jax: 0.10.0
libtpu: 0.0.40
codegen_flags: <defaults>
</compile_context>

<pallas_src>
from functools import partial

import jax
import jax.numpy as jnp
from jax.experimental import pallas as pl
from jax.experimental.pallas import tpu as pltpu

EPS = 1e-5  # BatchNorm1d default eps


def _round_up(n, m):
    return ((n + m - 1) // m) * m


# --------------------------------------------------------------------------
# Kernel 1: fc1 -> PReLU -> fc2 -> PReLU  + partial BN statistics per tile.
# --------------------------------------------------------------------------
def compute_kernel(x_ref, w1_ref, b1_ref, w2_ref, b2_ref, alpha_ref,
                   h2_ref, stats_ref, *, tile_b, batch, compute_dtype):
    alpha = alpha_ref[0, 0]  # PReLU single shared parameter (SMEM scalar)

    # fc1 on the (pre-concatenated, lane-padded) input: one K-wide matmul.
    h = jnp.dot(x_ref[...], w1_ref[...], preferred_element_type=jnp.float32)
    h = h + b1_ref[...]
    h = jnp.where(h > 0, h, alpha * h)                      # PReLU

    # fc2 (cast activations to the matmul dtype; accumulate in f32).
    h2 = jnp.dot(h.astype(compute_dtype), w2_ref[...],
                 preferred_element_type=jnp.float32)
    h2 = h2 + b2_ref[...]
    h2 = jnp.where(h2 > 0, h2, alpha * h2)                  # PReLU

    h2_ref[...] = h2

    # Partial batch statistics; mask out batch-padding rows.
    row = jax.lax.broadcasted_iota(jnp.int32, (tile_b, 1), 0)
    valid = (pl.program_id(0) * tile_b + row) < batch
    h2m = jnp.where(valid, h2, 0.0)
    ssum = jnp.sum(h2m, axis=0, keepdims=True)              # (1, N_pad)
    ssq = jnp.sum(h2m * h2m, axis=0, keepdims=True)         # (1, N_pad)
    pad = jnp.zeros((6, h2.shape[1]), jnp.float32)
    stats_ref[...] = jnp.concatenate([ssum, ssq, pad], axis=0)   # (8, N_pad)


# --------------------------------------------------------------------------
# Kernel 2: apply folded batch-norm affine  out = h2 * scale + shift.
# --------------------------------------------------------------------------
def normalize_kernel(h2_ref, scale_ref, shift_ref, out_ref):
    out_ref[...] = h2_ref[...] * scale_ref[...] + shift_ref[...]


# --------------------------------------------------------------------------
# Wrapper
# --------------------------------------------------------------------------
def merge_layer2(x1, x2, params, *, compute_dtype=jnp.float32, tile_b_max=512):
    """x1: (B, dim1), x2: (B, dim2) -> (B, dim5) float32."""
    B, dim1 = x1.shape
    dim2 = x2.shape[1]
    K = dim1 + dim2
    H = params["w1"].shape[1]
    N = params["w2"].shape[1]

    # Lane-dense padding of all feature dims.
    K_pad = _round_up(K, 128)
    H_pad = _round_up(H, 128)
    N_pad = _round_up(N, 128)

    # Batch tiling (at least 8-row aligned; big tiles when B is large).
    tile_b = min(tile_b_max, _round_up(B, 8))
    B_pad = _round_up(B, tile_b)
    n_tiles = B_pad // tile_b

    # Fused concat + zero padding (zeros are exact in every downstream step).
    x = jnp.zeros((B_pad, K_pad), compute_dtype)
    x = x.at[:B, :dim1].set(x1.astype(compute_dtype))
    x = x.at[:B, dim1:K].set(x2.astype(compute_dtype))

    w1 = jnp.zeros((K_pad, H_pad), compute_dtype).at[:K, :H].set(
        params["w1"].astype(compute_dtype))
    b1 = jnp.zeros((1, H_pad), jnp.float32).at[0, :H].set(params["b1"])
    w2 = jnp.zeros((H_pad, N_pad), compute_dtype).at[:H, :N].set(
        params["w2"].astype(compute_dtype))
    b2 = jnp.zeros((1, N_pad), jnp.float32).at[0, :N].set(params["b2"])
    gamma = jnp.zeros((N_pad,), jnp.float32).at[:N].set(params["gamma"])
    beta = jnp.zeros((N_pad,), jnp.float32).at[:N].set(params["beta"])
    alpha = params["alpha"].reshape(1, 1).astype(jnp.float32)

    cparams = pltpu.CompilerParams(
        dimension_semantics=("parallel",),
        vmem_limit_bytes=32 * 1024 * 1024,
    )

    kernel1 = partial(compute_kernel, tile_b=tile_b, batch=B,
                      compute_dtype=compute_dtype)

    h2, stats = pl.pallas_call(
        kernel1,
        out_shape=(
            jax.ShapeDtypeStruct((B_pad, N_pad), jnp.float32),
            jax.ShapeDtypeStruct((n_tiles * 8, N_pad), jnp.float32),
        ),
        grid=(n_tiles,),
        in_specs=[
            pl.BlockSpec((tile_b, K_pad), lambda i: (i, 0)),   # x tile
            pl.BlockSpec((K_pad, H_pad), lambda i: (0, 0)),    # w1 (resident)
            pl.BlockSpec((1, H_pad), lambda i: (0, 0)),        # b1
            pl.BlockSpec((H_pad, N_pad), lambda i: (0, 0)),    # w2 (resident)
            pl.BlockSpec((1, N_pad), lambda i: (0, 0)),        # b2
            pl.BlockSpec((1, 1), lambda i: (0, 0),
                         memory_space=pltpu.MemorySpace.SMEM), # alpha scalar
        ],
        out_specs=(
            pl.BlockSpec((tile_b, N_pad), lambda i: (i, 0)),   # h2 tile
            pl.BlockSpec((8, N_pad), lambda i: (i, 0)),        # per-tile stats
        ),
        compiler_params=cparams,
    )(x, w1, b1, w2, b2, alpha)

    # Aggregate partial statistics (tiny: n_tiles x N_pad) and fold BN affine.
    stats = stats.reshape(n_tiles, 8, N_pad)
    total_sum = jnp.sum(stats[:, 0, :], axis=0)
    total_sq = jnp.sum(stats[:, 1, :], axis=0)
    mean = total_sum / B
    var = total_sq / B - mean * mean          # biased variance (train-mode BN)
    inv = jax.lax.rsqrt(var + EPS)
    scale = (gamma * inv).reshape(1, N_pad)
    shift = (beta - mean * gamma * inv).reshape(1, N_pad)

    out = pl.pallas_call(
        normalize_kernel,
        out_shape=jax.ShapeDtypeStruct((B_pad, N_pad), jnp.float32),
        grid=(n_tiles,),
        in_specs=[
            pl.BlockSpec((tile_b, N_pad), lambda i: (i, 0)),
            pl.BlockSpec((1, N_pad), lambda i: (0, 0)),
            pl.BlockSpec((1, N_pad), lambda i: (0, 0)),
        ],
        out_specs=pl.BlockSpec((tile_b, N_pad), lambda i: (i, 0)),
        compiler_params=cparams,
    )(h2, scale, shift)

    return out[:B, :N]


# --------------------------------------------------------------------------
# Parameter init mirroring the PyTorch module's __init__.
# --------------------------------------------------------------------------
def init_params(key, dim1, dim2, dim4, dim5):
    k1, k2, k3, k4 = jax.random.split(key, 4)
    fan_in1, fan_in2 = dim1 + dim2, dim4
    std1 = (2.0 / (fan_in1 + dim4)) ** 0.5     # xavier normal
    std2 = (2.0 / (fan_in2 + dim5)) ** 0.5
    w1 = jax.random.normal(k1, (fan_in1, dim4), jnp.float32) * std1  # (in, out)
    w2 = jax.random.normal(k2, (dim4, dim5), jnp.float32) * std2
    b1 = jax.random.uniform(k3, (dim4,), jnp.float32,
                            -1.0 / fan_in1 ** 0.5, 1.0 / fan_in1 ** 0.5)
    b2 = jax.random.uniform(k4, (dim5,), jnp.float32,
                            -1.0 / fan_in2 ** 0.5, 1.0 / fan_in2 ** 0.5)
    return {
        "w1": w1, "b1": b1, "w2": w2, "b2": b2,
        "alpha": jnp.array([0.25], jnp.float32),     # PReLU default
        "gamma": jnp.ones((dim5,), jnp.float32),     # BN weight
        "beta": jnp.zeros((dim5,), jnp.float32),     # BN bias
    }


# --------------------------------------------------------------------------
# Pure-JAX reference (matches the PyTorch forward in train mode).
# --------------------------------------------------------------------------
def ref_forward(x1, x2, p, compute_dtype=jnp.float32):
    x = jnp.concatenate([x1, x2], axis=1).astype(compute_dtype)
    a = p["alpha"][0]
    h = jnp.dot(x, p["w1"].astype(compute_dtype),
                preferred_element_type=jnp.float32) + p["b1"][None, :]
    h = jnp.where(h > 0, h, a * h)
    h2 = jnp.dot(h.astype(compute_dtype), p["w2"].astype(compute_dtype),
                 preferred_element_type=jnp.float32) + p["b2"][None, :]
    h2 = jnp.where(h2 > 0, h2, a * h2)
    m = h2.mean(0, keepdims=True)
    v = ((h2 - m) ** 2).mean(0, keepdims=True)
    return (h2 - m) / jnp.sqrt(v + EPS) * p["gamma"][None, :] + p["beta"][None, :]


if __name__ == "__main__":
    key = jax.random.PRNGKey(0)
    B, dim1, dim2, dim4, dim5 = 8, 16, 16, 32, 32

    kx1, kx2, kp = jax.random.split(key, 3)
    x1 = jax.random.normal(kx1, (B, dim1), jnp.float32)
    x2 = jax.random.normal(kx2, (B, dim2), jnp.float32)
    params = init_params(kp, dim1, dim2, dim4, dim5)

    # f32 path: exact check against the reference.
    out_f32 = merge_layer2(x1, x2, params, compute_dtype=jnp.float32)
    jax.block_until_ready(out_f32)
    assert out_f32.shape == (B, dim5)
    ref_f32 = ref_forward(x1, x2, params, jnp.float32)
    assert jnp.allclose(out_f32, ref_f32, atol=5e-4, rtol=5e-4)

    # bf16 matmul path (recommended for v6e/v7x): check against a
    # bf16-consistent reference.
    out_bf16 = merge_layer2(x1, x2, params, compute_dtype=jnp.bfloat16)
    jax.block_until_ready(out_bf16)
    ref_bf16 = ref_forward(x1, x2, params, jnp.bfloat16)
    assert jnp.allclose(out_bf16, ref_bf16, atol=3e-2, rtol=3e-2)

    print("KERNEL_OK")
</pallas_src>

<mosaic_0001>
module attributes {stable_mosaic.version = 11 : i64} {
  func.func @compute_kernel(%arg0: i32, %arg1: memref<8x128xf32, #tpu.memory_space<vmem>>, %arg2: memref<128x128xf32, #tpu.memory_space<vmem>>, %arg3: memref<1x128xf32, #tpu.memory_space<vmem>>, %arg4: memref<128x128xf32, #tpu.memory_space<vmem>>, %arg5: memref<1x128xf32, #tpu.memory_space<vmem>>, %arg6: memref<1x1xf32, #tpu.memory_space<smem>>, %arg7: memref<8x128xf32, #tpu.memory_space<vmem>>, %arg8: memref<8x128xf32, #tpu.memory_space<vmem>>) attributes {dimension_semantics = [#tpu.dimension_semantics<parallel>], iteration_bounds = array<i64: 1>, scalar_prefetch = 0 : i64, scratch_operands = 0 : i64, tpu.core_type = #tpu.core_type<tc>, window_params = [{transform_indices = @transform_0, window_bounds = array<i64: 8, 128>}, {pipeline_mode = #tpu.pipeline_mode<synchronous>, transform_indices = @transform_1, window_bounds = array<i64: 128, 128>}, {pipeline_mode = #tpu.pipeline_mode<synchronous>, transform_indices = @transform_2, window_bounds = array<i64: 1, 128>}, {pipeline_mode = #tpu.pipeline_mode<synchronous>, transform_indices = @transform_3, window_bounds = array<i64: 128, 128>}, {pipeline_mode = #tpu.pipeline_mode<synchronous>, transform_indices = @transform_4, window_bounds = array<i64: 1, 128>}, {transform_indices = @transform_5, window_bounds = array<i64: 1, 1>}, {transform_indices = @transform_6, window_bounds = array<i64: 8, 128>}, {transform_indices = @transform_7, window_bounds = array<i64: 8, 128>}]} {
    %c0 = arith.constant 0 : index
    %c0_0 = arith.constant 0 : index
    %0 = memref.load %arg6[%c0, %c0_0] : memref<1x1xf32, #tpu.memory_space<smem>>
    %c0_1 = arith.constant 0 : index
    %c0_2 = arith.constant 0 : index
    %1 = vector.load %arg1[%c0_1, %c0_2] : memref<8x128xf32, #tpu.memory_space<vmem>>, vector<8x128xf32>
    %c0_3 = arith.constant 0 : index
    %c0_4 = arith.constant 0 : index
    %2 = vector.load %arg2[%c0_3, %c0_4] : memref<128x128xf32, #tpu.memory_space<vmem>>, vector<128x128xf32>
    %cst = arith.constant dense<0.000000e+00> : vector<8x128xf32>
    %3 = tpu.matmul %1, %2, %cst {dimension_numbers = #tpu.dot_dimension_numbers<[1], [0], [0], [1], [0, 0, 1, 1], [], []>} : vector<8x128xf32>, vector<128x128xf32>, vector<8x128xf32> -> vector<8x128xf32>
    %c0_5 = arith.constant 0 : index
    %c0_6 = arith.constant 0 : index
    %4 = vector.load %arg3[%c0_5, %c0_6] : memref<1x128xf32, #tpu.memory_space<vmem>>, vector<1x128xf32>
    %5 = vector.broadcast %4 : vector<1x128xf32> to vector<8x128xf32>
    %6 = arith.addf %3, %5 : vector<8x128xf32>
    %cst_7 = arith.constant 0.000000e+00 : f32
    %7 = vector.broadcast %cst_7 : f32 to vector<8x128xf32>
    %8 = arith.cmpf ogt, %6, %7 : vector<8x128xf32>
    %9 = vector.broadcast %0 : f32 to vector<8x128xf32>
    %10 = arith.mulf %9, %6 : vector<8x128xf32>
    %11 = arith.select %8, %6, %10 : vector<8x128xi1>, vector<8x128xf32>
    %c0_8 = arith.constant 0 : index
    %c0_9 = arith.constant 0 : index
    %12 = vector.load %arg4[%c0_8, %c0_9] : memref<128x128xf32, #tpu.memory_space<vmem>>, vector<128x128xf32>
    %cst_10 = arith.constant dense<0.000000e+00> : vector<8x128xf32>
    %13 = tpu.matmul %11, %12, %cst_10 {dimension_numbers = #tpu.dot_dimension_numbers<[1], [0], [0], [1], [0, 0, 1, 1], [], []>} : vector<8x128xf32>, vector<128x128xf32>, vector<8x128xf32> -> vector<8x128xf32>
    %c0_11 = arith.constant 0 : index
    %c0_12 = arith.constant 0 : index
    %14 = vector.load %arg5[%c0_11, %c0_12] : memref<1x128xf32, #tpu.memory_space<vmem>>, vector<1x128xf32>
    %15 = vector.broadcast %14 : vector<1x128xf32> to vector<8x128xf32>
    %16 = arith.addf %13, %15 : vector<8x128xf32>
    %cst_13 = arith.constant 0.000000e+00 : f32
    %17 = vector.broadcast %cst_13 : f32 to vector<8x128xf32>
    %18 = arith.cmpf ogt, %16, %17 : vector<8x128xf32>
    %19 = vector.broadcast %0 : f32 to vector<8x128xf32>
    %20 = arith.mulf %19, %16 : vector<8x128xf32>
    %21 = arith.select %18, %16, %20 : vector<8x128xi1>, vector<8x128xf32>
    %c0_14 = arith.constant 0 : index
    %c0_15 = arith.constant 0 : index
    %22 = vector.load %arg7[%c0_14, %c0_15] : memref<8x128xf32, #tpu.memory_space<vmem>>, vector<8x128xf32>
    tpu.vector_store %arg7[%c0_14, %c0_15], %21 {strides = array<i32>} : memref<8x128xf32, #tpu.memory_space<vmem>>, vector<8x128xf32>,
    %23 = tpu.iota {dimensions = array<i32: 0>} : vector<8x1xi32>
    %c8_i32 = arith.constant 8 : i32
    %24 = arith.muli %arg0, %c8_i32 : i32
    %25 = vector.broadcast %24 : i32 to vector<8x1xi32>
    %26 = arith.addi %25, %23 : vector<8x1xi32>
    %c8_i32_16 = arith.constant 8 : i32
    %27 = vector.broadcast %c8_i32_16 : i32 to vector<8x1xi32>
    %28 = arith.cmpi slt, %26, %27 : vector<8x1xi32>
    %cst_17 = arith.constant 0.000000e+00 : f32
    %29 = vector.shape_cast %28 : vector<8x1xi1> to vector<8x1xi1>
    %30 = vector.broadcast %29 : vector<8x1xi1> to vector<8x128xi1>
    %31 = vector.broadcast %cst_17 : f32 to vector<8x128xf32>
    %32 = arith.select %30, %21, %31 : vector<8x128xi1>, vector<8x128xf32>
    %cst_18 = arith.constant dense<0.000000e+00> : vector<128xf32>
    %33 = vector.multi_reduction <add>, %32, %cst_18 [0] : vector<8x128xf32> to vector<128xf32>
    %34 = vector.shape_cast %33 : vector<128xf32> to vector<1x128xf32>
    %35 = arith.mulf %32, %32 : vector<8x128xf32>
    %cst_19 = arith.constant dense<0.000000e+00> : vector<128xf32>
    %36 = vector.multi_reduction <add>, %35, %cst_19 [0] : vector<8x128xf32> to vector<128xf32>
    %37 = vector.shape_cast %36 : vector<128xf32> to vector<1x128xf32>
    %cst_20 = arith.constant 0.000000e+00 : f32
    %38 = vector.broadcast %cst_20 : f32 to vector<6x128xf32>
    %39 = tpu.concatenate %34, %37, %38 in 0 : vector<1x128xf32>, vector<1x128xf32>, vector<6x128xf32> -> vector<8x128xf32>
    %c0_21 = arith.constant 0 : index
    %c0_22 = arith.constant 0 : index
    %40 = vector.load %arg8[%c0_21, %c0_22] : memref<8x128xf32, #tpu.memory_space<vmem>>, vector<8x128xf32>
    tpu.vector_store %arg8[%c0_21, %c0_22], %39 {strides = array<i32>} : memref<8x128xf32, #tpu.memory_space<vmem>>, vector<8x128xf32>,
    return
  }
  func.func @transform_0(%arg0: i32) -> (i32, i32) {
    %c0_i32 = arith.constant 0 : i32
    %c0_i32_0 = arith.constant 0 : i32
    return %arg0, %c0_i32 : i32, i32
  }
  func.func @transform_1(%arg0: i32) -> (i32, i32) {
    %c0_i32 = arith.constant 0 : i32
    %c0_i32_0 = arith.constant 0 : i32
    %c0_i32_1 = arith.constant 0 : i32
    return %c0_i32, %c0_i32_0 : i32, i32
  }
  func.func @transform_2(%arg0: i32) -> (i32, i32) {
    %c0_i32 = arith.constant 0 : i32
    %c0_i32_0 = arith.constant 0 : i32
    %c0_i32_1 = arith.constant 0 : i32
    return %c0_i32, %c0_i32_0 : i32, i32
  }
  func.func @transform_3(%arg0: i32) -> (i32, i32) {
    %c0_i32 = arith.constant 0 : i32
    %c0_i32_0 = arith.constant 0 : i32
    %c0_i32_1 = arith.constant 0 : i32
    return %c0_i32, %c0_i32_0 : i32, i32
  }
  func.func @transform_4(%arg0: i32) -> (i32, i32) {
    %c0_i32 = arith.constant 0 : i32
    %c0_i32_0 = arith.constant 0 : i32
    %c0_i32_1 = arith.constant 0 : i32
    return %c0_i32, %c0_i32_0 : i32, i32
  }
  func.func @transform_5(%arg0: i32) -> (i32, i32) {
    %c0_i32 = arith.constant 0 : i32
    %c0_i32_0 = arith.constant 0 : i32
    %c0_i32_1 = arith.constant 0 : i32
    return %c0_i32, %c0_i32_0 : i32, i32
  }
  func.func @transform_6(%arg0: i32) -> (i32, i32) {
    %c0_i32 = arith.constant 0 : i32
    %c0_i32_0 = arith.constant 0 : i32
    return %arg0, %c0_i32 : i32, i32
  }
  func.func @transform_7(%arg0: i32) -> (i32, i32) {
    %c0_i32 = arith.constant 0 : i32
    %c0_i32_0 = arith.constant 0 : i32
    return %arg0, %c0_i32 : i32, i32
  }
}

</mosaic_0001>

<llo_original>
// kernel: tpu_custom_call.1
$region0: #{tpu_custom_call.1}
  #allocation0 [shape = 'u32[]', space=smem, size = 0x4, offset = 0x4, fixed_abs, tag = 'smem constant byte address 0x4 - core index']
  #allocation1 [shape = 'u32[144,128]{1,0:T(1,128)}', space=vmem, size = 0x12000, scoped, tag = 'internal scratch']
  #allocation2 [shape = 'f32[1,1]{1,0:T(1,128)S(6)}', space=smem, size = 0x200, scoped, tag = 'scoped memory for tpu_custom_call.1']
  %s0 = inlined_call_operand.hbm [shape: f32[8,128], index: 0, kind: input, shape index: {}]
  %s1 = inlined_call_operand.hbm [shape: f32[128,128], index: 1, kind: input, shape index: {}]
  %s2 = inlined_call_operand.vmem [shape: f32[1,128], index: 2, kind: input, shape index: {}]
  %s3 = inlined_call_operand.hbm [shape: f32[128,128], index: 3, kind: input, shape index: {}]
  %s4 = inlined_call_operand.vmem [shape: f32[1,128], index: 4, kind: input, shape index: {}]
  %s5 = inlined_call_operand.<no memory space> [shape: f32[1,1], index: 5, kind: input, shape index: {}]
  %s6 = inlined_call_operand.hbm [shape: f32[8,128], index: 6, kind: output, shape index: {0}]
  %s7 = inlined_call_operand.hbm [shape: f32[8,128], index: 7, kind: output, shape index: {1}]
  %8 = xla_tuple %s6, %s7
  %s9 = sld [smem:[#allocation0]]
  $region54: #{tpu_custom_call.1} parent=0
    _
  %s11 = ssub.s32 1, %s9
  %s12 = scalar_select 0, %s11, %s9
  %13 = sst [smem:[#allocation2]] %s5
  $region1: #{tpu_custom_call.1} parent=0
    #allocation3 [shape = 'u8[4096]{0}', space=vmem, size = 0x1000, scoped, tag = 'input window, operand 0, single buffered']
    #allocation4 [shape = 's32[1]{0}', space=sflag, size = 0x4, scoped, tag = 'scoped memory for tpu_custom_call.1']
    #allocation5 [shape = 's32[1]{0}', space=sflag, size = 0x4, scoped, tag = 'scoped memory for tpu_custom_call.1']
    #allocation6 [shape = 'u8[65536]{0}', space=vmem, size = 0x10000, scoped, tag = 'input window, operand 1, single buffered']
    #allocation7 [shape = 's32[1]{0}', space=sflag, size = 0x4, scoped, tag = 'scoped memory for tpu_custom_call.1']
    #allocation8 [shape = 'u8[65536]{0}', space=vmem, size = 0x10000, scoped, tag = 'input window, operand 3, single buffered']
    #allocation9 [shape = 'u8[4096]{0}', space=vmem, size = 0x1000, scoped, tag = 'output window, operand 0, single buffered']
    #allocation10 [shape = 'u8[4096]{0}', space=vmem, size = 0x1000, scoped, tag = 'output window, operand 1, single buffered']
    #allocation11 [shape = 's32[1]{0}', space=sflag, size = 0x4, scoped, tag = 'scoped memory for tpu_custom_call.1']
    %14 = vsyncpa [#allocation4], 0
    %15 = vsyncpa [#allocation7], 0
    %16 = vsyncpa [#allocation5], 0
    %17 = vsyncpa [#allocation11], 0
    // Predicated region
    $region2: #{tpu_custom_call.1} parent=1 // pred_check
      _
    $region3: #{tpu_custom_call.1} parent=1 // pred_check_branch
      %19 = sbr.rel (0) target = $region5
    $region4: #{tpu_custom_call.1} parent=1 // pred_region
      %s21 = ssub.s32 128, 128
      %22 = vsyncadd [#allocation4], %s21
      %s24 = sshll.u32 [#allocation3], 4
      %s25 = int_to_ptr.vmem [resolvable:$true] %s24
      %27 = dma.hbm_to_vmem [thread:$0]  %s0, 128, %s25, [#allocation4]
    $region5: #{tpu_custom_call.1} parent=1 // pred_fallthru
      _
    // Predicated region
    $region6: #{tpu_custom_call.1} parent=1 // pred_check
      _
    $region7: #{tpu_custom_call.1} parent=1 // pred_check_branch
      %29 = sbr.rel (0) target = $region9
    $region8: #{tpu_custom_call.1} parent=1 // pred_region
      %s31 = ssub.s32 2048, 2048
      %32 = vsyncadd [#allocation7], %s31
      %s33 = sshll.u32 [#allocation6], 4
      %s34 = int_to_ptr.vmem [resolvable:$true] %s33
      %39 = dma.hbm_to_vmem [thread:$0]  %s1, 2048, %s34, [#allocation7], 128, 128, 8
    $region9: #{tpu_custom_call.1} parent=1 // pred_fallthru
      _
    // Predicated region
    $region10: #{tpu_custom_call.1} parent=1 // pred_check
      _
    $region11: #{tpu_custom_call.1} parent=1 // pred_check_branch
      %41 = sbr.rel (0) target = $region13
    $region12: #{tpu_custom_call.1} parent=1 // pred_region
      _
    $region13: #{tpu_custom_call.1} parent=1 // pred_fallthru
      _
    // Predicated region
    $region14: #{tpu_custom_call.1} parent=1 // pred_check
      _
    $region15: #{tpu_custom_call.1} parent=1 // pred_check_branch
      %43 = sbr.rel (0) target = $region17
    $region16: #{tpu_custom_call.1} parent=1 // pred_region
      %s45 = ssub.s32 2048, 2048
      %46 = vsyncadd [#allocation7], %s45
      %s47 = sshll.u32 [#allocation8], 4
      %s48 = int_to_ptr.vmem [resolvable:$true] %s47
      %53 = dma.hbm_to_vmem [thread:$0]  %s3, 2048, %s48, [#allocation7], 128, 128, 8
    $region17: #{tpu_custom_call.1} parent=1 // pred_fallthru
      _
    // Predicated region
    $region18: #{tpu_custom_call.1} parent=1 // pred_check
      _
    $region19: #{tpu_custom_call.1} parent=1 // pred_check_branch
      %55 = sbr.rel (0) target = $region21
    $region20: #{tpu_custom_call.1} parent=1 // pred_region
      _
    $region21: #{tpu_custom_call.1} parent=1 // pred_fallthru
      _
    // Predicated region
    $region22: #{tpu_custom_call.1} parent=1 // pred_check
      _
    $region23: #{tpu_custom_call.1} parent=1 // pred_check_branch
      %57 = sbr.rel (0) target = $region25
    $region24: #{tpu_custom_call.1} parent=1 // pred_region
      _
    $region25: #{tpu_custom_call.1} parent=1 // pred_fallthru
      _
    // Predicated region
    $region26: #{tpu_custom_call.1} parent=1 // pred_check
      _
    $region27: #{tpu_custom_call.1} parent=1 // pred_check_branch
      %59 = sbr.rel (0) target = $region29
    $region28: #{tpu_custom_call.1} parent=1 // pred_region
      %60 = dma.done [#allocation4], 128
    $region29: #{tpu_custom_call.1} parent=1 // pred_fallthru
      _
    // Predicated region
    $region30: #{tpu_custom_call.1} parent=1 // pred_check
      _
    $region31: #{tpu_custom_call.1} parent=1 // pred_check_branch
      %62 = sbr.rel (0) target = $region33
    $region32: #{tpu_custom_call.1} parent=1 // pred_region
      %63 = dma.done [#allocation7], 2048
    $region33: #{tpu_custom_call.1} parent=1 // pred_fallthru
      _
    // Predicated region
    $region34: #{tpu_custom_call.1} parent=1 // pred_check
      _
    $region35: #{tpu_custom_call.1} parent=1 // pred_check_branch
      %65 = sbr.rel (0) target = $region37
    $region36: #{tpu_custom_call.1} parent=1 // pred_region
      %66 = dma.done [#allocation7], 2048
    $region37: #{tpu_custom_call.1} parent=1 // pred_fallthru
      _
    %s67 = sld [smem:[#allocation2]]
    %v68 = vld [vmem:[#allocation3] sm:$0xff]
    %v69 = vld [vmem:[#allocation6] sm:$0xff]
    %v70 = vld [vmem:[#allocation6 + $0x8] sm:$0xff]
    %v71 = vld [vmem:[#allocation6 + $0x10] sm:$0xff]
    %v72 = vld [vmem:[#allocation6 + $0x18] sm:$0xff]
    %v73 = vld [vmem:[#allocation6 + $0x20] sm:$0xff]
    %v74 = vld [vmem:[#allocation6 + $0x28] sm:$0xff]
    %v75 = vld [vmem:[#allocation6 + $0x30] sm:$0xff]
    %v76 = vld [vmem:[#allocation6 + $0x38] sm:$0xff]
    %v77 = vld [vmem:[#allocation6 + $0x40] sm:$0xff]
    %v78 = vld [vmem:[#allocation6 + $0x48] sm:$0xff]
    %v79 = vld [vmem:[#allocation6 + $0x50] sm:$0xff]
    %v80 = vld [vmem:[#allocation6 + $0x58] sm:$0xff]
    %v81 = vld [vmem:[#allocation6 + $0x60] sm:$0xff]
    %v82 = vld [vmem:[#allocation6 + $0x68] sm:$0xff]
    %v83 = vld [vmem:[#allocation6 + $0x70] sm:$0xff]
    %v84 = vld [vmem:[#allocation6 + $0x78] sm:$0xff]
    %v85 = vld [vmem:[%s2] sm:$0x1]
    %v87 = vlaneseq
    %v88 = vshrl.u32 %v87, 7
    %v89 = vsub.s32 0, %v88
    %v90 = vrot.slane %v85, %v89
    %92 = vmatprep.subr.mxu0 0.0
    %93 = vmatpush1.msra.mxu0 %v84
    %94 = vmatprep.subr.mxu0 0.0
    %95 = vmatpush1.msra.mxu0 %v83
    %96 = vmatprep.subr.mxu0 0.0
    %97 = vmatpush1.msra.mxu0 %v82
    %98 = vmatprep.subr.mxu0 0.0
    %99 = vmatpush1.msra.mxu0 %v81
    %100 = vmatprep.subr.mxu0 0.0
    %101 = vmatpush1.msra.mxu0 %v80
    %102 = vmatprep.subr.mxu0 0.0
    %103 = vmatpush1.msra.mxu0 %v79
    %104 = vmatprep.subr.mxu0 0.0
    %105 = vmatpush1.msra.mxu0 %v78
    %106 = vmatprep.subr.mxu0 0.0
    %107 = vmatpush1.msra.mxu0 %v77
    %108 = vmatprep.subr.mxu0 0.0
    %109 = vmatpush1.msra.mxu0 %v76
    %110 = vmatprep.subr.mxu0 0.0
    %111 = vmatpush1.msra.mxu0 %v75
    %112 = vmatprep.subr.mxu0 0.0
    %113 = vmatpush1.msra.mxu0 %v74
    %114 = vmatprep.subr.mxu0 0.0
    %115 = vmatpush1.msra.mxu0 %v73
    %116 = vmatprep.subr.mxu0 0.0
    %117 = vmatpush1.msra.mxu0 %v72
    %118 = vmatprep.subr.mxu0 0.0
    %119 = vmatpush1.msra.mxu0 %v71
    %120 = vmatprep.subr.mxu0 0.0
    %121 = vmatpush1.msra.mxu0 %v70
    %122 = vmatprep.subr.mxu0 0.0
    %123 = vmatpush1.msra.mxu0 %v69
    %124 = vmatprep.subr.mxu0 0.0
    %125 = vmatpush2.msra.mxu0 0.0
    %126 = vmatprep.subr.mxu0 0.0
    %127 = vmatpush2.msra.mxu0 0.0
    %128 = vmatprep.subr.mxu0 0.0
    %129 = vmatpush2.msra.mxu0 0.0
    %130 = vmatprep.subr.mxu0 0.0
    %131 = vmatpush2.msra.mxu0 0.0
    %132 = vmatprep.subr.mxu0 0.0
    %133 = vmatpush2.msra.mxu0 0.0
    %134 = vmatprep.subr.mxu0 0.0
    %135 = vmatpush2.msra.mxu0 0.0
    %136 = vmatprep.subr.mxu0 0.0
    %137 = vmatpush2.msra.mxu0 0.0
    %138 = vmatprep.subr.mxu0 0.0
    %139 = vmatpush2.msra.mxu0 0.0
    %140 = vmatprep.subr.mxu0 0.0
    %141 = vmatpush2.msra.mxu0 0.0
    %142 = vmatprep.subr.mxu0 0.0
    %143 = vmatpush2.msra.mxu0 0.0
    %144 = vmatprep.subr.mxu0 0.0
    %145 = vmatpush2.msra.mxu0 0.0
    %146 = vmatprep.subr.mxu0 0.0
    %147 = vmatpush2.msra.mxu0 0.0
    %148 = vmatprep.subr.mxu0 0.0
    %149 = vmatpush2.msra.mxu0 0.0
    %150 = vmatprep.subr.mxu0 0.0
    %151 = vmatpush2.msra.mxu0 0.0
    %152 = vmatprep.subr.mxu0 0.0
    %153 = vmatpush2.msra.mxu0 0.0
    %154 = vmatprep.subr.mxu0 0.0
    %155 = vmatpush2.msra.mxu0 0.0
    %156 = vmatprep.mubr.f32.mxu0 0.0
    %157 = vmatmul.mubr.f32.gmra.mxu0 %v68
    %v158 = vpop.f32.mrf.mxu0
    %v159 = vadd.f32 %v90, %v158
    %v160 = vpop.f32.mrf.mxu0
    %161 = vdwg.mxu0
    %vm162 = vcmp.gt.f32.partialorder %v159, 0.0
    %v163 = vstv %s67
    %v164 = vmul.f32 %v163, %v159
    %v165 = vsel %vm162, %v159, %v164
    %v166 = vld [vmem:[#allocation8] sm:$0xff]
    %v167 = vld [vmem:[#allocation8 + $0x8] sm:$0xff]
    %v168 = vld [vmem:[#allocation8 + $0x10] sm:$0xff]
    %v169 = vld [vmem:[#allocation8 + $0x18] sm:$0xff]
    %v170 = vld [vmem:[#allocation8 + $0x20] sm:$0xff]
    %v171 = vld [vmem:[#allocation8 + $0x28] sm:$0xff]
    %v172 = vld [vmem:[#allocation8 + $0x30] sm:$0xff]
    %v173 = vld [vmem:[#allocation8 + $0x38] sm:$0xff]
    %v174 = vld [vmem:[#allocation8 + $0x40] sm:$0xff]
    %v175 = vld [vmem:[#allocation8 + $0x48] sm:$0xff]
    %v176 = vld [vmem:[#allocation8 + $0x50] sm:$0xff]
    %v177 = vld [vmem:[#allocation8 + $0x58] sm:$0xff]
    %v178 = vld [vmem:[#allocation8 + $0x60] sm:$0xff]
    %v179 = vld [vmem:[#allocation8 + $0x68] sm:$0xff]
    %v180 = vld [vmem:[#allocation8 + $0x70] sm:$0xff]
    %v181 = vld [vmem:[#allocation8 + $0x78] sm:$0xff]
    %v182 = vld [vmem:[%s4] sm:$0x1]
    %v184 = vlaneseq
    %v185 = vshrl.u32 %v184, 7
    %v186 = vsub.s32 0, %v185
    %v187 = vrot.slane %v182, %v186
    %189 = vmatprep.subr.mxu0 0.0
    %190 = vmatpush1.msra.mxu0 %v181
    %191 = vmatprep.subr.mxu0 0.0
    %192 = vmatpush1.msra.mxu0 %v180
    %193 = vmatprep.subr.mxu0 0.0
    %194 = vmatpush1.msra.mxu0 %v179
    %195 = vmatprep.subr.mxu0 0.0
    %196 = vmatpush1.msra.mxu0 %v178
    %197 = vmatprep.subr.mxu0 0.0
    %198 = vmatpush1.msra.mxu0 %v177
    %199 = vmatprep.subr.mxu0 0.0
    %200 = vmatpush1.msra.mxu0 %v176
    %201 = vmatprep.subr.mxu0 0.0
    %202 = vmatpush1.msra.mxu0 %v175
    %203 = vmatprep.subr.mxu0 0.0
    %204 = vmatpush1.msra.mxu0 %v174
    %205 = vmatprep.subr.mxu0 0.0
    %206 = vmatpush1.msra.mxu0 %v173
    %207 = vmatprep.subr.mxu0 0.0
    %208 = vmatpush1.msra.mxu0 %v172
    %209 = vmatprep.subr.mxu0 0.0
    %210 = vmatpush1.msra.mxu0 %v171
    %211 = vmatprep.subr.mxu0 0.0
    %212 = vmatpush1.msra.mxu0 %v170
    %213 = vmatprep.subr.mxu0 0.0
    %214 = vmatpush1.msra.mxu0 %v169
    %215 = vmatprep.subr.mxu0 0.0
    %216 = vmatpush1.msra.mxu0 %v168
    %217 = vmatprep.subr.mxu0 0.0
    %218 = vmatpush1.msra.mxu0 %v167
    %219 = vmatprep.subr.mxu0 0.0
    %220 = vmatpush1.msra.mxu0 %v166
    %221 = vmatprep.subr.mxu0 0.0
    %222 = vmatpush2.msra.mxu0 0.0
    %223 = vmatprep.subr.mxu0 0.0
    %224 = vmatpush2.msra.mxu0 0.0
    %225 = vmatprep.subr.mxu0 0.0
    %226 = vmatpush2.msra.mxu0 0.0
    %227 = vmatprep.subr.mxu0 0.0
    %228 = vmatpush2.msra.mxu0 0.0
    %229 = vmatprep.subr.mxu0 0.0
    %230 = vmatpush2.msra.mxu0 0.0
    %231 = vmatprep.subr.mxu0 0.0
    %232 = vmatpush2.msra.mxu0 0.0
    %233 = vmatprep.subr.mxu0 0.0
    %234 = vmatpush2.msra.mxu0 0.0
    %235 = vmatprep.subr.mxu0 0.0
    %236 = vmatpush2.msra.mxu0 0.0
    %237 = vmatprep.subr.mxu0 0.0
    %238 = vmatpush2.msra.mxu0 0.0
    %239 = vmatprep.subr.mxu0 0.0
    %240 = vmatpush2.msra.mxu0 0.0
    %241 = vmatprep.subr.mxu0 0.0
    %242 = vmatpush2.msra.mxu0 0.0
    %243 = vmatprep.subr.mxu0 0.0
    %244 = vmatpush2.msra.mxu0 0.0
    %245 = vmatprep.subr.mxu0 0.0
    %246 = vmatpush2.msra.mxu0 0.0
    %247 = vmatprep.subr.mxu0 0.0
    %248 = vmatpush2.msra.mxu0 0.0
    %249 = vmatprep.subr.mxu0 0.0
    %250 = vmatpush2.msra.mxu0 0.0
    %251 = vmatprep.subr.mxu0 0.0
    %252 = vmatpush2.msra.mxu0 0.0
    %253 = vmatprep.mubr.f32.mxu0 0.0
    %254 = vmatmul.mubr.f32.gmra.mxu0 %v165
    %v255 = vpop.f32.mrf.mxu0
    %v256 = vadd.f32 %v187, %v255
    %v257 = vpop.f32.mrf.mxu0
    %258 = vdwg.mxu0
    %vm259 = vcmp.gt.f32.partialorder %v256, 0.0
    %v260 = vmul.f32 %v163, %v256
    %v261 = vsel %vm259, %v256, %v260
    %262 = vst [vmem:[#allocation9] sm:$0xff] %v261
    %v263 = vlaneseq
    %v264 = vshrl.u32 %v263, 7
    %s265 = smul.u32 0, 8
    %v266 = vstv %s265
    %v267 = vadd.s32 %v266, %v264
    %vm268 = vcmp.lt.s32.totalorder %v267, 8
    %v269 = vsel %vm268, 1, 0
    %vm270 = vcmp.eq.s32.totalorder %v269, 1
    %v271 = vsel %vm270, %v261, 0.0
    %v272 = vrot.slane %v271, 4
    %v273 = vadd.f32 %v271, %v272
    %v274 = vrot.slane %v273, 2
    %v275 = vadd.f32 %v273, %v274
    %v276 = vrot.slane %v275, 1
    %v277 = vadd.f32 %v275, %v276
    %v278 = vmul.f32 %v271, %v271
    %v279 = vrot.slane %v278, 4
    %v280 = vadd.f32 %v278, %v279
    %v281 = vrot.slane %v280, 2
    %v282 = vadd.f32 %v280, %v281
    %v283 = vrot.slane %v282, 1
    %v284 = vadd.f32 %v282, %v283
    %vm285 = vcmask 1040384
    %v286 = vsel %vm285, %v277, %v284
    %vm287 = vcmask 1041408
    %v288 = vsel %vm287, %v286, 0.0
    %289 = vst [vmem:[#allocation10] sm:$0xff] %v288
    // Predicated region
    $region38: #{tpu_custom_call.1} parent=1 // pred_check
      _
    $region39: #{tpu_custom_call.1} parent=1 // pred_check_branch
      %291 = sbr.rel (0) target = $region41
    $region40: #{tpu_custom_call.1} parent=1 // pred_region
      %s293 = ssub.s32 128, 128
      %294 = vsyncadd [#allocation5], %s293
      %s296 = sshll.u32 [#allocation9], 4
      %s297 = int_to_ptr.vmem [resolvable:$true] %s296
      %299 = dma.vmem_to_hbm [thread:$0]  %s297, 128, %s6, [#allocation5]
    $region41: #{tpu_custom_call.1} parent=1 // pred_fallthru
      _
    // Predicated region
    $region42: #{tpu_custom_call.1} parent=1 // pred_check
      _
    $region43: #{tpu_custom_call.1} parent=1 // pred_check_branch
      %301 = sbr.rel (0) target = $region45
    $region44: #{tpu_custom_call.1} parent=1 // pred_region
      %s303 = ssub.s32 128, 128
      %304 = vsyncadd [#allocation11], %s303
      %s306 = sshll.u32 [#allocation10], 4
      %s307 = int_to_ptr.vmem [resolvable:$true] %s306
      %309 = dma.vmem_to_hbm [thread:$0]  %s307, 128, %s7, [#allocation11]
    $region45: #{tpu_custom_call.1} parent=1 // pred_fallthru
      _
    // Predicated region
    $region46: #{tpu_custom_call.1} parent=1 // pred_check
      _
    $region47: #{tpu_custom_call.1} parent=1 // pred_check_branch
      %311 = sbr.rel (0) target = $region49
    $region48: #{tpu_custom_call.1} parent=1 // pred_region
      %312 = dma.done [#allocation5], 128
    $region49: #{tpu_custom_call.1} parent=1 // pred_fallthru
      _
    // Predicated region
    $region50: #{tpu_custom_call.1} parent=1 // pred_check
      _
    $region51: #{tpu_custom_call.1} parent=1 // pred_check_branch
      %314 = sbr.rel (0) target = $region53
    $region52: #{tpu_custom_call.1} parent=1 // pred_region
      %315 = dma.done [#allocation11], 128
    $region53: #{tpu_custom_call.1} parent=1 // pred_fallthru
      _
    %316 = vsyncpa [#allocation4], 1
    %317 = vsyncpa [#allocation7], 1
    %318 = vsyncpa [#allocation5], 1
    %319 = vsyncpa [#allocation11], 1

</llo_original>
